<compile_context>
chip_gen: v7x
topology: tpu7x:2x2x1
jax: 0.10.0
libtpu: 0.0.40
codegen_flags: <defaults>
</compile_context>

<pallas_src>
import numpy as np
import jax
import jax.numpy as jnp
from jax import lax
from jax.experimental import pallas as pl
from jax.experimental.pallas import tpu as pltpu

TAU = 12
BETA = 0.5
_MIB = 1024 * 1024


def _round_up(a, m):
    return ((a + m - 1) // m) * m


def _vmem_limit(est_bytes):
    # Derived scoped-VMEM limit: never below 32 MiB (v5e's default scope is
    # only 16 MiB), with 2x headroom over the estimated working set.
    return int(min(max(32 * _MIB, 2 * est_bytes), 96 * _MIB))


# ---------------------------------------------------------------------------
# Kernel 1: fc0   red = x @ w0 + b0   (bf16 in, f32 accumulate, D grid-tiled)
# ---------------------------------------------------------------------------
def _make_fc0_kernel(B):
    f32 = jnp.float32

    def kernel(x_ref, w0_ref, b0_ref, red_ref):
        # x_ref: (B, tile_T, tile_D) bf16   w0_ref: (tile_D, R) bf16
        # red_ref: (B, tile_T, R) f32, resident across the D (k) grid axis.
        k = pl.program_id(1)
        w0 = w0_ref[...]
        b0 = b0_ref[...]
        for b in range(B):                      # B is tiny; static unroll
            part = jnp.dot(x_ref[b], w0, preferred_element_type=f32)

            @pl.when(k == 0)
            def _(part=part, b=b):
                red_ref[b] = part + b0          # dense leading-dim store

            @pl.when(k > 0)
            def _(part=part, b=b):
                red_ref[b] = red_ref[b] + part  # accumulate over D tiles

    return kernel


# ---------------------------------------------------------------------------
# Kernel 2: GRU recurrence + q head
#   - gi hoisted out of the step loop (one matmul per b per tile)
#   - per-step chain: one h @ [whr|whz|whn|wq] matmul + gate math
#   - q rides along as an extra column of that matmul (one-step lag)
# ---------------------------------------------------------------------------
def _make_gru_kernel(B, tile_T, H, Hg):
    f32 = jnp.float32

    def kernel(red_ref, wi_ref, whx_ref, bi_ref, bhn_ref, wq_ref, bq_ref,
               q_ref, h_scr, gi_scr):
        @pl.when(pl.program_id(0) == 0)
        def _():
            h_scr[...] = jnp.zeros_like(h_scr)              # h0 = 0

        # ---- hoisted input-gate projection for the whole tile --------------
        bi = bi_ref[...]                                    # (1, 3*Hg)
        for b in range(B):
            gi_scr[:, b, :] = (
                jnp.dot(red_ref[b], wi_ref[...], preferred_element_type=f32)
                + bi)

        whx = whx_ref[...]          # (H, 4*Hg): [whr | whz | whn | wq] padded
        bhn = bhn_ref[...]          # (1, H)  b_hn (stays inside r * (...))
        bq = bq_ref[...]            # (1, 1)

        def step(tt, h):
            gi = gi_scr[tt]                                       # (B, 3*Hg)
            gh = jnp.dot(h, whx, preferred_element_type=f32)      # (B, 4*Hg)
            # gate blocks live at lane-tile-aligned offsets 0/Hg/2Hg: free
            r = jax.nn.sigmoid(gi[:, 0:H] + gh[:, 0:H])
            z = jax.nn.sigmoid(gi[:, Hg:Hg + H] + gh[:, Hg:Hg + H])
            n = jnp.tanh(gi[:, 2 * Hg:2 * Hg + H]
                         + r * (gh[:, 2 * Hg:2 * Hg + H] + bhn))
            h_new = (1.0 - z) * n + z * h
            # q head: column 3*Hg of whx holds wq, so gh[:, 3*Hg] is the
            # quality of the hidden state fed INTO this step, i.e. frame tt-1.
            # tt==0 writes a dummy to index 0 that tt==1 overwrites.
            q_ref[jnp.maximum(tt - 1, 0)] = gh[:, 3 * Hg:3 * Hg + 1] + bq
            return h_new

        h_fin = lax.fori_loop(0, tile_T, step, h_scr[...], unroll=4)
        h_scr[...] = h_fin            # carry hidden state to the next T tile
        # last frame of this tile (never appears as a "previous" state above)
        q_ref[tile_T - 1] = (
            jnp.sum(h_fin * wq_ref[...], axis=-1, keepdims=True) + bq)

    return kernel


# ---------------------------------------------------------------------------
# Kernel 3: temporal pooling + per-sample mean (lane-dense (B, T) layout)
# ---------------------------------------------------------------------------
def _make_tp_kernel(B, Tp):
    f32 = jnp.float32

    def kernel(lens_ref, q_ref, score_ref):
        q = q_ref[...]                                        # (B, Tp)
        lens = lens_ref[...]                                  # (B, 1)
        t_idx = lax.broadcasted_iota(jnp.int32, (B, Tp), 1)
        valid = t_idx.astype(f32) < lens
        validf = valid.astype(f32)

        # m[t] = sum_{s=t..t+TAU-1, s<L} q[s] e^{-q[s]} / sum e^{-q[s]}
        # (exp(-1e4) of the reference padding underflows to exactly 0 in f32).
        # TODO(synk): exp(-q) can overflow for strongly negative q, matching
        # the PyTorch reference; a per-window max-shift would be more robust.
        eq = jnp.exp(-q) * validf
        num = q * eq
        zpad = jnp.zeros((B, TAU - 1), f32)
        numpad = jnp.concatenate([num, zpad], axis=1)         # (B, Tp+TAU-1)
        eqpad = jnp.concatenate([eq, zpad], axis=1)
        m_num = num
        m_den = eq
        for k in range(1, TAU):                               # static shifts
            m_num = m_num + numpad[:, k:k + Tp]
            m_den = m_den + eqpad[:, k:k + Tp]
        m = m_num / jnp.where(m_den > 0.0, m_den, 1.0)

        # l[t] = min_{s=max(0, t-TAU+1)..t} q[s]   (causal running min)
        qpadl = jnp.concatenate(
            [jnp.full((B, TAU - 1), jnp.inf, f32), q], axis=1)
        l = q
        for k in range(1, TAU):
            l = jnp.minimum(l, qpadl[:, TAU - 1 - k: TAU - 1 - k + Tp])

        tp = BETA * m + (1.0 - BETA) * l                      # (B, Tp)
        score = jnp.sum(jnp.where(valid, tp, 0.0), axis=1, keepdims=True) / lens
        score_ref[...] = score                                # (B, 1)

    return kernel


# ---------------------------------------------------------------------------
# Wrapper
# ---------------------------------------------------------------------------
def vsfa_forward(x, lengths, params):
    """x: (B, T, D) float32 (PyTorch batch_first), lengths: (B,) float32."""
    x = jnp.asarray(x, jnp.float32)
    B, T, D = x.shape
    R = params['w0'].shape[1]
    H = params['whr'].shape[0]
    Hg = _round_up(H, 128)                  # lane-padded gate stride
    Wg, Wx = 3 * Hg, 4 * Hg

    # ---- tile sizes --------------------------------------------------------
    # T tiles: <=256, multiple of 8, chosen to minimise padded (dead) frames.
    # 256 keeps the double-buffered bf16 x block a few MiB at D=4096, the GRU
    # gi scratch ~3 MiB, and everything inside v7x's 64 MiB VMEM while still
    # amortising the ~0.35 us/grid-step overhead.
    NT = -(-T // 256)
    tile_T = _round_up(-(-T // NT), 8)
    T_pad = NT * tile_T
    # D (fc0 contraction) grid-tiled so blocks stay MXU/VMEM sized at D=4096.
    tile_D = D if D <= 512 else 512
    D_pad = _round_up(D, tile_D)
    ND = D_pad // tile_D
    if T_pad != T or D_pad != D:
        # zero-padded frames/features are masked out later by `lengths`
        x = jnp.pad(x, ((0, 0), (0, T_pad - T), (0, D_pad - D)))

    # ---- stage 1: fc0 (bf16 operands, f32 accumulation) --------------------
    x_bf = x.astype(jnp.bfloat16)
    w0_bf = jnp.pad(params['w0'], ((0, D_pad - D), (0, 0))).astype(jnp.bfloat16)
    fc0_est = (2 * B * tile_T * tile_D * 2 + 2 * tile_D * R * 2
               + 2 * R * 4 + 2 * B * tile_T * R * 4)
    red = pl.pallas_call(
        _make_fc0_kernel(B),
        out_shape=jax.ShapeDtypeStruct((B, T_pad, R), jnp.float32),
        grid=(NT, ND),
        in_specs=[pl.BlockSpec((B, tile_T, tile_D), lambda i, k: (0, i, k)),
                  pl.BlockSpec((tile_D, R), lambda i, k: (k, 0)),
                  pl.BlockSpec((1, R), lambda i, k: (0, 0))],
        out_specs=pl.BlockSpec((B, tile_T, R), lambda i, k: (0, i, 0)),
        compiler_params=pltpu.CompilerParams(
            dimension_semantics=("parallel", "arbitrary"),
            vmem_limit_bytes=_vmem_limit(fc0_est)),
    )(x_bf, w0_bf, params['b0'])

    # ---- stage 2: GRU recurrence + q head ----------------------------------
    # Pack gate weights with a 128-lane stride per gate so per-step slices are
    # whole-lane-tile picks; wq rides as column 3*Hg of the recurrent matrix.
    wi_p = (jnp.zeros((R, Wg), jnp.float32)
            .at[:, 0:H].set(params['wir'])
            .at[:, Hg:Hg + H].set(params['wiz'])
            .at[:, 2 * Hg:2 * Hg + H].set(params['win']))
    whx_p = (jnp.zeros((H, Wx), jnp.float32)
             .at[:, 0:H].set(params['whr'])
             .at[:, Hg:Hg + H].set(params['whz'])
             .at[:, 2 * Hg:2 * Hg + H].set(params['whn'])
             .at[:, 3 * Hg:3 * Hg + 1].set(params['wq'].T))
    bi_p = (jnp.zeros((1, Wg), jnp.float32)
            .at[:, 0:H].set(params['br'])
            .at[:, Hg:Hg + H].set(params['bz'])
            .at[:, 2 * Hg:2 * Hg + H].set(params['bin']))

    gru_est = (2 * B * tile_T * R * 4
               + 2 * (R * Wg + H * Wx + Wg + 2 * H + 1) * 4
               + 2 * tile_T * B * 4
               + 8 * 128 * 4 + tile_T * 8 * Wg * 4)
    # TODO(synk): for v7x's 2 TensorCores, add a leading "parallel" grid axis
    # over batch groups (per-group h/gi scratch + b-indexed red/q specs).
    q3 = pl.pallas_call(
        _make_gru_kernel(B, tile_T, H, Hg),
        out_shape=jax.ShapeDtypeStruct((T_pad, B, 1), jnp.float32),
        grid=(NT,),
        in_specs=[pl.BlockSpec((B, tile_T, R), lambda j: (0, j, 0)),
                  pl.BlockSpec((R, Wg), lambda j: (0, 0)),
                  pl.BlockSpec((H, Wx), lambda j: (0, 0)),
                  pl.BlockSpec((1, Wg), lambda j: (0, 0)),
                  pl.BlockSpec((1, H), lambda j: (0, 0)),
                  pl.BlockSpec((1, H), lambda j: (0, 0)),
                  pl.BlockSpec((1, 1), lambda j: (0, 0))],
        out_specs=pl.BlockSpec((tile_T, B, 1), lambda j: (j, 0, 0)),
        scratch_shapes=[pltpu.VMEM((B, H), jnp.float32),          # h carry
                        pltpu.VMEM((tile_T, B, Wg), jnp.float32)],  # gi tile
        compiler_params=pltpu.CompilerParams(
            dimension_semantics=("arbitrary",),
            vmem_limit_bytes=_vmem_limit(gru_est)),
    )(red, wi_p, whx_p, bi_p, params['bhn'], params['wq'], params['bq'])

    # ---- stage 3: temporal pooling + per-sample mean -----------------------
    # TODO(synk): could be fused into the GRU epilogue (pl.when last tile) to
    # drop one launch + the tiny q HBM round trip.
    q_bt = q3[:, :, 0].T                       # tiny (B, T_pad) layout plumbing
    lens2 = jnp.asarray(lengths, jnp.float32).reshape(B, 1)
    score = pl.pallas_call(
        _make_tp_kernel(B, T_pad),
        out_shape=jax.ShapeDtypeStruct((B, 1), jnp.float32),
        in_specs=[pl.BlockSpec(memory_space=pltpu.MemorySpace.VMEM)] * 2,
        out_specs=pl.BlockSpec(memory_space=pltpu.MemorySpace.VMEM),
    )(lens2, q_bt)
    # torch.zeros_like(input_length): score has the shape/dtype of input_length
    return score[:, 0]


# ---------------------------------------------------------------------------
# Parameters + numpy reference (for the self-check)
# ---------------------------------------------------------------------------
def init_params(key, D, R, H):
    """Deterministic synthetic parameters (PyTorch-style U(-1/sqrt(fan), 1/sqrt(fan)))."""
    ks = jax.random.split(key, 14)

    def u(k, shape, fan):
        b = 1.0 / np.sqrt(fan)
        return jax.random.uniform(k, shape, jnp.float32, -b, b)

    return {
        'w0':  u(ks[0], (D, R), D),    # ann.fc0.weight.T
        'b0':  u(ks[1], (1, R), D),    # ann.fc0.bias
        'wir': u(ks[2], (R, H), H),    # rnn.weight_ih_l0 (r|z|n), transposed
        'wiz': u(ks[3], (R, H), H),
        'win': u(ks[4], (R, H), H),
        'whr': u(ks[5], (H, H), H),    # rnn.weight_hh_l0, transposed
        'whz': u(ks[6], (H, H), H),
        'whn': u(ks[7], (H, H), H),
        'br':  u(ks[8], (1, H), H),    # b_ir + b_hr folded (equivalent)
        'bz':  u(ks[9], (1, H), H),    # b_iz + b_hz folded (equivalent)
        'bin': u(ks[10], (1, H), H),   # b_in
        'bhn': u(ks[11], (1, H), H),   # b_hn (stays inside r_t * (...))
        'wq':  u(ks[12], (1, H), H),   # q.weight
        'bq':  u(ks[13], (1, 1), H),   # q.bias
    }


def _sigmoid_np(x):
    return 1.0 / (1.0 + np.exp(-x))


def reference_forward(x, lengths, params):
    """Pure numpy re-implementation of the PyTorch forward (sanity check)."""
    p = {k: np.asarray(v, np.float64) for k, v in params.items()}
    x = np.asarray(x, np.float64)
    B, T, D = x.shape
    H = p['whr'].shape[0]
    red = x @ p['w0'] + p['b0']                       # ANN (n_ANNlayers=1)
    q = np.zeros((B, T))
    for b in range(B):
        h = np.zeros(H)
        for t in range(T):
            xt = red[b, t]
            r = _sigmoid_np(xt @ p['wir'] + h @ p['whr'] + p['br'][0])
            z = _sigmoid_np(xt @ p['wiz'] + h @ p['whz'] + p['bz'][0])
            n = np.tanh(xt @ p['win'] + p['bin'][0] + r * (h @ p['whn'] + p['bhn'][0]))
            h = (1.0 - z) * n + z * h
            q[b, t] = h @ p['wq'][0] + p['bq'][0, 0]
    lengths = np.asarray(lengths)
    scores = np.zeros(B, np.float32)
    for b in range(B):
        L = int(lengths[b])
        qi = q[b, :L]
        l = np.array([qi[max(0, t - TAU + 1): t + 1].min() for t in range(L)])
        m = np.zeros(L)
        for t in range(L):
            w = qi[t: min(t + TAU, L)]
            e = np.exp(-w)
            m[t] = (w * e).sum() / e.sum()
        tp = BETA * m + (1.0 - BETA) * l
        scores[b] = tp.mean()
    return scores


if __name__ == "__main__":
    # Small shapes consistent with the module: batch=2, seq=16, feat=64,
    # reduced=32, hidden=32 (scaled-down VSFA defaults).
    B, T, D, R, H = 2, 16, 64, 32, 32
    key = jax.random.PRNGKey(0)
    kx, kp = jax.random.split(key)

    x = 0.5 * jax.random.normal(kx, (B, T, D), jnp.float32)
    input_length = jnp.array([16.0, 13.0], jnp.float32)   # float lengths
    params = init_params(kp, D, R, H)

    score = vsfa_forward(x, input_length, params)
    score = jax.block_until_ready(score)

    ref = reference_forward(x, input_length, params)
    assert score.shape == (B,)
    assert np.all(np.isfinite(np.asarray(score)))
    # tolerance accounts for the bf16 fc0 operands (f32 accumulation)
    assert np.allclose(np.asarray(score), ref, rtol=4e-2, atol=4e-2), (score, ref)
    print("KERNEL_OK")
</pallas_src>

<mosaic_0001>
module attributes {stable_mosaic.version = 11 : i64} {
  func.func @kernel(%arg0: i32, %arg1: i32, %arg2: memref<2x16x64xbf16, #tpu.memory_space<vmem>>, %arg3: memref<64x32xbf16, #tpu.memory_space<vmem>>, %arg4: memref<1x32xf32, #tpu.memory_space<vmem>>, %arg5: memref<2x16x32xf32, #tpu.memory_space<vmem>>) attributes {dimension_semantics = [#tpu.dimension_semantics<parallel>, #tpu.dimension_semantics<arbitrary>], iteration_bounds = array<i64: 1, 1>, scalar_prefetch = 0 : i64, scratch_operands = 0 : i64, tpu.core_type = #tpu.core_type<tc>, window_params = [{transform_indices = @transform_0, window_bounds = array<i64: 2, 16, 64>}, {transform_indices = @transform_1, window_bounds = array<i64: 64, 32>}, {pipeline_mode = #tpu.pipeline_mode<synchronous>, transform_indices = @transform_2, window_bounds = array<i64: 1, 32>}, {transform_indices = @transform_3, window_bounds = array<i64: 2, 16, 32>}]} {
    %c0 = arith.constant 0 : index
    %c0_0 = arith.constant 0 : index
    %0 = vector.load %arg3[%c0, %c0_0] : memref<64x32xbf16, #tpu.memory_space<vmem>>, vector<64x32xbf16>
    %c0_1 = arith.constant 0 : index
    %c0_2 = arith.constant 0 : index
    %1 = vector.load %arg4[%c0_1, %c0_2] : memref<1x32xf32, #tpu.memory_space<vmem>>, vector<1x32xf32>
    %c0_3 = arith.constant 0 : index
    %c0_4 = arith.constant 0 : index
    %c0_5 = arith.constant 0 : index
    %2 = vector.load %arg2[%c0_3, %c0_4, %c0_5] : memref<2x16x64xbf16, #tpu.memory_space<vmem>>, vector<1x16x64xbf16>
    %3 = vector.shape_cast %2 : vector<1x16x64xbf16> to vector<16x64xbf16>
    %cst = arith.constant dense<0.000000e+00> : vector<16x32xf32>
    %4 = tpu.matmul %3, %0, %cst {dimension_numbers = #tpu.dot_dimension_numbers<[1], [0], [0], [1], [0, 0, 1, 1], [], []>} : vector<16x64xbf16>, vector<64x32xbf16>, vector<16x32xf32> -> vector<16x32xf32>
    %c0_i32 = arith.constant 0 : i32
    %5 = arith.cmpi eq, %arg1, %c0_i32 : i32
    %6 = arith.extui %5 : i1 to i32
    %c0_i32_6 = arith.constant 0 : i32
    %7 = arith.cmpi ne, %6, %c0_i32_6 : i32
    scf.if %7 {
      %20 = vector.broadcast %1 : vector<1x32xf32> to vector<16x32xf32>
      %21 = arith.addf %4, %20 : vector<16x32xf32>
      %c0_16 = arith.constant 0 : index
      %c0_17 = arith.constant 0 : index
      %c0_18 = arith.constant 0 : index
      %22 = vector.load %arg5[%c0_16, %c0_17, %c0_18] : memref<2x16x32xf32, #tpu.memory_space<vmem>>, vector<1x16x32xf32>
      %23 = vector.shape_cast %22 : vector<1x16x32xf32> to vector<16x32xf32>
      %24 = vector.shape_cast %21 : vector<16x32xf32> to vector<1x16x32xf32>
      tpu.vector_store %arg5[%c0_16, %c0_17, %c0_18], %24 {strides = array<i32>} : memref<2x16x32xf32, #tpu.memory_space<vmem>>, vector<1x16x32xf32>,
    } else {
    }
    %c0_i32_7 = arith.constant 0 : i32
    %8 = arith.cmpi sgt, %arg1, %c0_i32_7 : i32
    %9 = arith.extui %8 : i1 to i32
    %c0_i32_8 = arith.constant 0 : i32
    %10 = arith.cmpi ne, %9, %c0_i32_8 : i32
    scf.if %10 {
      %c0_16 = arith.constant 0 : index
      %c0_17 = arith.constant 0 : index
      %c0_18 = arith.constant 0 : index
      %20 = vector.load %arg5[%c0_16, %c0_17, %c0_18] : memref<2x16x32xf32, #tpu.memory_space<vmem>>, vector<1x16x32xf32>
      %21 = vector.shape_cast %20 : vector<1x16x32xf32> to vector<16x32xf32>
      %22 = arith.addf %21, %4 : vector<16x32xf32>
      %c0_19 = arith.constant 0 : index
      %c0_20 = arith.constant 0 : index
      %c0_21 = arith.constant 0 : index
      %23 = vector.load %arg5[%c0_19, %c0_20, %c0_21] : memref<2x16x32xf32, #tpu.memory_space<vmem>>, vector<1x16x32xf32>
      %24 = vector.shape_cast %23 : vector<1x16x32xf32> to vector<16x32xf32>
      %25 = vector.shape_cast %22 : vector<16x32xf32> to vector<1x16x32xf32>
      tpu.vector_store %arg5[%c0_19, %c0_20, %c0_21], %25 {strides = array<i32>} : memref<2x16x32xf32, #tpu.memory_space<vmem>>, vector<1x16x32xf32>,
    } else {
    }
    %c1 = arith.constant 1 : index
    %c0_9 = arith.constant 0 : index
    %c0_10 = arith.constant 0 : index
    %11 = vector.load %arg2[%c1, %c0_9, %c0_10] : memref<2x16x64xbf16, #tpu.memory_space<vmem>>, vector<1x16x64xbf16>
    %12 = vector.shape_cast %11 : vector<1x16x64xbf16> to vector<16x64xbf16>
    %cst_11 = arith.constant dense<0.000000e+00> : vector<16x32xf32>
    %13 = tpu.matmul %12, %0, %cst_11 {dimension_numbers = #tpu.dot_dimension_numbers<[1], [0], [0], [1], [0, 0, 1, 1], [], []>} : vector<16x64xbf16>, vector<64x32xbf16>, vector<16x32xf32> -> vector<16x32xf32>
    %c0_i32_12 = arith.constant 0 : i32
    %14 = arith.cmpi eq, %arg1, %c0_i32_12 : i32
    %15 = arith.extui %14 : i1 to i32
    %c0_i32_13 = arith.constant 0 : i32
    %16 = arith.cmpi ne, %15, %c0_i32_13 : i32
    scf.if %16 {
      %20 = vector.broadcast %1 : vector<1x32xf32> to vector<16x32xf32>
      %21 = arith.addf %13, %20 : vector<16x32xf32>
      %c1_16 = arith.constant 1 : index
      %c0_17 = arith.constant 0 : index
      %c0_18 = arith.constant 0 : index
      %22 = vector.load %arg5[%c1_16, %c0_17, %c0_18] : memref<2x16x32xf32, #tpu.memory_space<vmem>>, vector<1x16x32xf32>
      %23 = vector.shape_cast %22 : vector<1x16x32xf32> to vector<16x32xf32>
      %24 = vector.shape_cast %21 : vector<16x32xf32> to vector<1x16x32xf32>
      tpu.vector_store %arg5[%c1_16, %c0_17, %c0_18], %24 {strides = array<i32>} : memref<2x16x32xf32, #tpu.memory_space<vmem>>, vector<1x16x32xf32>,
    } else {
    }
    %c0_i32_14 = arith.constant 0 : i32
    %17 = arith.cmpi sgt, %arg1, %c0_i32_14 : i32
    %18 = arith.extui %17 : i1 to i32
    %c0_i32_15 = arith.constant 0 : i32
    %19 = arith.cmpi ne, %18, %c0_i32_15 : i32
    scf.if %19 {
      %c1_16 = arith.constant 1 : index
      %c0_17 = arith.constant 0 : index
      %c0_18 = arith.constant 0 : index
      %20 = vector.load %arg5[%c1_16, %c0_17, %c0_18] : memref<2x16x32xf32, #tpu.memory_space<vmem>>, vector<1x16x32xf32>
      %21 = vector.shape_cast %20 : vector<1x16x32xf32> to vector<16x32xf32>
      %22 = arith.addf %21, %13 : vector<16x32xf32>
      %c1_19 = arith.constant 1 : index
      %c0_20 = arith.constant 0 : index
      %c0_21 = arith.constant 0 : index
      %23 = vector.load %arg5[%c1_19, %c0_20, %c0_21] : memref<2x16x32xf32, #tpu.memory_space<vmem>>, vector<1x16x32xf32>
      %24 = vector.shape_cast %23 : vector<1x16x32xf32> to vector<16x32xf32>
      %25 = vector.shape_cast %22 : vector<16x32xf32> to vector<1x16x32xf32>
      tpu.vector_store %arg5[%c1_19, %c0_20, %c0_21], %25 {strides = array<i32>} : memref<2x16x32xf32, #tpu.memory_space<vmem>>, vector<1x16x32xf32>,
    } else {
    }
    return
  }
  func.func @transform_0(%arg0: i32, %arg1: i32) -> (i32, i32, i32) {
    %c0_i32 = arith.constant 0 : i32
    %c0_i32_0 = arith.constant 0 : i32
    return %c0_i32, %arg0, %arg1 : i32, i32, i32
  }
  func.func @transform_1(%arg0: i32, %arg1: i32) -> (i32, i32) {
    %c0_i32 = arith.constant 0 : i32
    %c0_i32_0 = arith.constant 0 : i32
    return %arg1, %c0_i32 : i32, i32
  }
  func.func @transform_2(%arg0: i32, %arg1: i32) -> (i32, i32) {
    %c0_i32 = arith.constant 0 : i32
    %c0_i32_0 = arith.constant 0 : i32
    %c0_i32_1 = arith.constant 0 : i32
    return %c0_i32, %c0_i32_0 : i32, i32
  }
  func.func @transform_3(%arg0: i32, %arg1: i32) -> (i32, i32, i32) {
    %c0_i32 = arith.constant 0 : i32
    %c0_i32_0 = arith.constant 0 : i32
    %c0_i32_1 = arith.constant 0 : i32
    return %c0_i32, %arg0, %c0_i32_0 : i32, i32, i32
  }
}

</mosaic_0001>

<llo_original>
// kernel: tpu_custom_call.1
$region0: #{tpu_custom_call.1}
  #allocation0 [shape = 'u32[]', space=smem, size = 0x4, offset = 0x4, fixed_abs, tag = 'smem constant byte address 0x4 - core index']
  #allocation1 [shape = 'u32[144,128]{1,0:T(1,128)}', space=vmem, size = 0x12000, scoped, tag = 'internal scratch']
  %s0 = inlined_call_operand.vmem [shape: bf16[2,16,64], index: 0, kind: input, shape index: {}]
  %s1 = inlined_call_operand.vmem [shape: bf16[64,32], index: 1, kind: input, shape index: {}]
  %s2 = inlined_call_operand.vmem [shape: f32[1,32], index: 2, kind: input, shape index: {}]
  %s3 = inlined_call_operand.hbm [shape: f32[2,16,32], index: 3, kind: output, shape index: {}]
  %s4 = sld [smem:[#allocation0]]
  $region38: #{tpu_custom_call.1} parent=0
    _
  %s6 = ssub.s32 1, %s4
  %s7 = scalar_select 0, %s6, %s4
  $region1: #{tpu_custom_call.1} parent=0
    #allocation2 [shape = 'u8[16384]{0}', space=vmem, size = 0x4000, scoped, tag = 'output window, operand 0, single buffered']
    #allocation3 [shape = 's32[1]{0}', space=sflag, size = 0x4, scoped, tag = 'scoped memory for tpu_custom_call.1']
    %8 = vsyncpa [#allocation3], 0
    // Predicated region
    $region2: #{tpu_custom_call.1} parent=1 // pred_check
      _
    $region3: #{tpu_custom_call.1} parent=1 // pred_check_branch
      %10 = sbr.rel (0) target = $region5
    $region4: #{tpu_custom_call.1} parent=1 // pred_region
      _
    $region5: #{tpu_custom_call.1} parent=1 // pred_fallthru
      _
    // Predicated region
    $region6: #{tpu_custom_call.1} parent=1 // pred_check
      _
    $region7: #{tpu_custom_call.1} parent=1 // pred_check_branch
      %12 = sbr.rel (0) target = $region9
    $region8: #{tpu_custom_call.1} parent=1 // pred_region
      _
    $region9: #{tpu_custom_call.1} parent=1 // pred_fallthru
      _
    // Predicated region
    $region10: #{tpu_custom_call.1} parent=1 // pred_check
      _
    $region11: #{tpu_custom_call.1} parent=1 // pred_check_branch
      %14 = sbr.rel (0) target = $region13
    $region12: #{tpu_custom_call.1} parent=1 // pred_region
      _
    $region13: #{tpu_custom_call.1} parent=1 // pred_fallthru
      _
    %v16 = vld [vmem:[%s1] sm:$0xf]
    %v17 = vld [vmem:[%s1 + $0x4] sm:$0xf]
    %v18 = vld [vmem:[%s1 + $0x8] sm:$0xf]
    %v19 = vld [vmem:[%s1 + $0xc] sm:$0xf]
    %v20 = vld [vmem:[%s1 + $0x10] sm:$0xf]
    %v21 = vld [vmem:[%s1 + $0x14] sm:$0xf]
    %v22 = vld [vmem:[%s1 + $0x18] sm:$0xf]
    %v23 = vld [vmem:[%s1 + $0x1c] sm:$0xf]
    %v24 = vld [vmem:[%s2] sm:$0x1]
    %v25 = vld [vmem:[%s0] sm:$0xf]
    %v26 = vld [vmem:[%s0 + $0x4] sm:$0xf]
    %v29 = vunpack.c.l.b16 %v25
    %v30 = vunpack.c.l.b16 %v26
    %v31 = vpack.c.b16 %v30, %v29
    %v40 = vunpack.c.l.b16 %v16
    %v41 = vunpack.c.l.b16 %v17
    %v42 = vunpack.c.l.b16 %v18
    %v43 = vunpack.c.l.b16 %v19
    %v44 = vunpack.c.l.b16 %v20
    %v45 = vunpack.c.l.b16 %v21
    %v46 = vunpack.c.l.b16 %v22
    %v47 = vunpack.c.l.b16 %v23
    %v48 = vpack.c.b16 %v41, %v40
    %v49 = vpack.c.b16 %v43, %v42
    %v50 = vpack.c.b16 %v45, %v44
    %v51 = vpack.c.b16 %v47, %v46
    %vm56 = vcmask 523264
    %v58 = vsel %vm56, %v31, 0
    %60 = vmatprep.subr.bf16.mxu0 0
    %61 = vmatpush1.bf16.msra.mxu0 %v48
    %62 = vmatprep.subr.bf16.mxu0 0
    %63 = vmatpush1.bf16.msra.mxu0 %v49
    %64 = vmatprep.subr.bf16.mxu0 0
    %65 = vmatpush1.bf16.msra.mxu0 %v50
    %66 = vmatprep.subr.bf16.mxu0 0
    %67 = vmatpush1.bf16.msra.mxu0 %v51
    %68 = vmatprep.subr.bf16.mxu0 0
    %69 = vmatpush1.bf16.msra.mxu0 0
    %70 = vmatprep.subr.bf16.mxu0 0
    %71 = vmatpush1.bf16.msra.mxu0 0
    %72 = vmatprep.subr.bf16.mxu0 0
    %73 = vmatpush1.bf16.msra.mxu0 0
    %74 = vmatprep.subr.bf16.mxu0 0
    %75 = vmatpush1.bf16.msra.mxu0 0
    %76 = vmatprep.subr.bf16.mxu0 0
    %77 = vmatpush1.bf16.msra.mxu0 0
    %78 = vmatprep.subr.bf16.mxu0 0
    %79 = vmatpush1.bf16.msra.mxu0 0
    %80 = vmatprep.subr.bf16.mxu0 0
    %81 = vmatpush1.bf16.msra.mxu0 0
    %82 = vmatprep.subr.bf16.mxu0 0
    %83 = vmatpush1.bf16.msra.mxu0 0
    %84 = vmatprep.subr.bf16.mxu0 0
    %85 = vmatpush1.bf16.msra.mxu0 0
    %86 = vmatprep.subr.bf16.mxu0 0
    %87 = vmatpush1.bf16.msra.mxu0 0
    %88 = vmatprep.subr.bf16.mxu0 0
    %89 = vmatpush1.bf16.msra.mxu0 0
    %90 = vmatprep.subr.bf16.mxu0 0
    %91 = vmatpush1.bf16.msra.mxu0 0
    %92 = vmatprep.mubr.bf16.mxu0 0
    %93 = vmatmul.mubr.bf16.gmra.mrb[0].mxu0 %v58
    %v94 = vpop.f32.mrb[0].mxu0
    %v95 = vadd.f32 0.0, %v94
    %v96 = vpop.f32.mrb[0].mxu0
    %v97 = vpop.f32.mrb[0].mxu0
    %v98 = vadd.f32 0.0, %v97
    %v99 = vpop.f32.mrb[0].mxu0
    %100 = vdwg.mxu0
    %p101 = scmp.eq.s32.totalorder 0, 0
    // Predicated region
    $region14: #{tpu_custom_call.1} parent=1 // pred_check
      %p102 = pneg %p101
    $region15: #{tpu_custom_call.1} parent=1 // pred_check_branch
      %104 = sbr.rel (%p102) target = $region17
    $region16: #{tpu_custom_call.1} parent=1 // pred_region
      %v106 = vlaneseq
      %v107 = vshrl.u32 %v106, 7
      %v108 = vsub.s32 0, %v107
      %v109 = vrot.slane %v24, %v108
      %v111 = vadd.f32 %v95, %v109
      %v112 = vadd.f32 %v98, %v109
      %vm113 = vcmask 261120
      %114 = vst.msk [vmem:[#allocation2] sm:$0xff] %vm113, %v111
      %115 = vst.msk [vmem:[#allocation2 + $0x8] sm:$0xff] %vm113, %v112
    $region17: #{tpu_custom_call.1} parent=1 // pred_fallthru
      _
    %p116 = scmp.gt.s32.totalorder 0, 0
    // Predicated region
    $region18: #{tpu_custom_call.1} parent=1 // pred_check
      %p117 = pneg %p116
    $region19: #{tpu_custom_call.1} parent=1 // pred_check_branch
      %119 = sbr.rel (%p117) target = $region21
    $region20: #{tpu_custom_call.1} parent=1 // pred_region
      %v120 = vld [vmem:[#allocation2] sm:$0xff]
      %v121 = vld [vmem:[#allocation2 + $0x8] sm:$0xff]
      %v122 = vadd.f32 %v120, %v95
      %v123 = vadd.f32 %v121, %v98
      %vm124 = vcmask 261120
      %125 = vst.msk [vmem:[#allocation2] sm:$0xff] %vm124, %v122
      %126 = vst.msk [vmem:[#allocation2 + $0x8] sm:$0xff] %vm124, %v123
    $region21: #{tpu_custom_call.1} parent=1 // pred_fallthru
      _
    %s127 = scalar_lea.vmem %s0, 8
    %v128 = vld [vmem:[%s127] sm:$0xf]
    %v129 = vld [vmem:[%s127 + $0x4] sm:$0xf]
    %v132 = vunpack.c.l.b16 %v128
    %v133 = vunpack.c.l.b16 %v129
    %v134 = vpack.c.b16 %v133, %v132
    %v136 = vsel %vm56, %v134, 0
    %138 = vmatprep.subr.bf16.mxu0 0
    %139 = vmatpush1.bf16.msra.mxu0 %v48
    %140 = vmatprep.subr.bf16.mxu0 0
    %141 = vmatpush1.bf16.msra.mxu0 %v49
    %142 = vmatprep.subr.bf16.mxu0 0
    %143 = vmatpush1.bf16.msra.mxu0 %v50
    %144 = vmatprep.subr.bf16.mxu0 0
    %145 = vmatpush1.bf16.msra.mxu0 %v51
    %146 = vmatprep.subr.bf16.mxu0 0
    %147 = vmatpush1.bf16.msra.mxu0 0
    %148 = vmatprep.subr.bf16.mxu0 0
    %149 = vmatpush1.bf16.msra.mxu0 0
    %150 = vmatprep.subr.bf16.mxu0 0
    %151 = vmatpush1.bf16.msra.mxu0 0
    %152 = vmatprep.subr.bf16.mxu0 0
    %153 = vmatpush1.bf16.msra.mxu0 0
    %154 = vmatprep.subr.bf16.mxu0 0
    %155 = vmatpush1.bf16.msra.mxu0 0
    %156 = vmatprep.subr.bf16.mxu0 0
    %157 = vmatpush1.bf16.msra.mxu0 0
    %158 = vmatprep.subr.bf16.mxu0 0
    %159 = vmatpush1.bf16.msra.mxu0 0
    %160 = vmatprep.subr.bf16.mxu0 0
    %161 = vmatpush1.bf16.msra.mxu0 0
    %162 = vmatprep.subr.bf16.mxu0 0
    %163 = vmatpush1.bf16.msra.mxu0 0
    %164 = vmatprep.subr.bf16.mxu0 0
    %165 = vmatpush1.bf16.msra.mxu0 0
    %166 = vmatprep.subr.bf16.mxu0 0
    %167 = vmatpush1.bf16.msra.mxu0 0
    %168 = vmatprep.subr.bf16.mxu0 0
    %169 = vmatpush1.bf16.msra.mxu0 0
    %170 = vmatprep.mubr.bf16.mxu0 0
    %171 = vmatmul.mubr.bf16.gmra.mrb[0].mxu0 %v136
    %v172 = vpop.f32.mrb[0].mxu0
    %v173 = vadd.f32 0.0, %v172
    %v174 = vpop.f32.mrb[0].mxu0
    %v175 = vpop.f32.mrb[0].mxu0
    %v176 = vadd.f32 0.0, %v175
    %v177 = vpop.f32.mrb[0].mxu0
    %178 = vdwg.mxu0
    // Predicated region
    $region22: #{tpu_custom_call.1} parent=1 // pred_check
      %p179 = pneg %p101
    $region23: #{tpu_custom_call.1} parent=1 // pred_check_branch
      %181 = sbr.rel (%p179) target = $region25
    $region24: #{tpu_custom_call.1} parent=1 // pred_region
      %v183 = vlaneseq
      %v184 = vshrl.u32 %v183, 7
      %v185 = vsub.s32 0, %v184
      %v186 = vrot.slane %v24, %v185
      %v188 = vadd.f32 %v173, %v186
      %v189 = vadd.f32 %v176, %v186
      %s190 = scalar_lea.vmem [#allocation2], 16
      %vm191 = vcmask 261120
      %192 = vst.msk [vmem:[%s190] sm:$0xff] %vm191, %v188
      %193 = vst.msk [vmem:[%s190 + $0x8] sm:$0xff] %vm191, %v189
    $region25: #{tpu_custom_call.1} parent=1 // pred_fallthru
      _
    // Predicated region
    $region26: #{tpu_custom_call.1} parent=1 // pred_check
      %p194 = pneg %p116
    $region27: #{tpu_custom_call.1} parent=1 // pred_check_branch
      %196 = sbr.rel (%p194) target = $region29
    $region28: #{tpu_custom_call.1} parent=1 // pred_region
      %s197 = scalar_lea.vmem [#allocation2], 16
      %v198 = vld [vmem:[%s197] sm:$0xff]
      %v199 = vld [vmem:[%s197 + $0x8] sm:$0xff]
      %v200 = vadd.f32 %v198, %v173
      %v201 = vadd.f32 %v199, %v176
      %vm202 = vcmask 261120
      %203 = vst.msk [vmem:[%s197] sm:$0xff] %vm202, %v200
      %204 = vst.msk [vmem:[%s197 + $0x8] sm:$0xff] %vm202, %v201
    $region29: #{tpu_custom_call.1} parent=1 // pred_fallthru
      _
    // Predicated region
    $region30: #{tpu_custom_call.1} parent=1 // pred_check
      _
    $region31: #{tpu_custom_call.1} parent=1 // pred_check_branch
      %206 = sbr.rel (0) target = $region33
    $region32: #{tpu_custom_call.1} parent=1 // pred_region
      %s208 = ssub.s32 512, 512
      %209 = vsyncadd [#allocation3], %s208
      %s210 = sshll.u32 [#allocation2], 4
      %s211 = int_to_ptr.vmem [resolvable:$true] %s210
      %216 = dma.vmem_to_hbm [thread:$0]  %s211, 512, %s3, [#allocation3], 128, 128, 8
    $region33: #{tpu_custom_call.1} parent=1 // pred_fallthru
      _
    // Predicated region
    $region34: #{tpu_custom_call.1} parent=1 // pred_check
      _
    $region35: #{tpu_custom_call.1} parent=1 // pred_check_branch
      %218 = sbr.rel (0) target = $region37
    $region36: #{tpu_custom_call.1} parent=1 // pred_region
      %219 = dma.done [#allocation3], 512
    $region37: #{tpu_custom_call.1} parent=1 // pred_fallthru
      _
    %220 = vsyncpa [#allocation3], 1

</llo_original>
